<compile_context>
chip_gen: v6e
topology: v6e:2x2x1
jax: 0.10.0
libtpu: 0.0.40
codegen_flags: <defaults>
</compile_context>

<pallas_src>
import jax
import jax.numpy as jnp
from jax.experimental import pallas as pl
from jax.experimental.pallas import tpu as pltpu


# ---------------------------------------------------------------------------
# Kernel
# ---------------------------------------------------------------------------
def ffn_kernel(x_ref, w1_ref, b1_ref, w2_ref, b2_ref, o_ref, acc_ref):
    k = pl.program_id(1)
    nk = pl.num_programs(1)

    @pl.when(k == 0)
    def _():
        # Fold the fc2 bias into the accumulator init (saves an epilogue add).
        acc_ref[...] = jnp.broadcast_to(b2_ref[...], acc_ref.shape).astype(
            jnp.float32)

    # fc1 slice: (tm, d_model_p) @ (d_model_p, tk) -> f32 (tm, tk)
    h = jnp.dot(x_ref[...], w1_ref[...], preferred_element_type=jnp.float32)
    h = jnp.maximum(h + b1_ref[...], 0.0)          # bias + ReLU in f32
    # dropout: identity (eval mode)

    # fc2 slice: accumulate (tm, tk) @ (tk, d_model_p) into f32 scratch
    acc_ref[...] += jnp.dot(h.astype(w2_ref.dtype), w2_ref[...],
                            preferred_element_type=jnp.float32)

    @pl.when(k == nk - 1)
    def _():
        o_ref[...] = acc_ref[...].astype(o_ref.dtype)


# ---------------------------------------------------------------------------
# Config / tiling helpers
# ---------------------------------------------------------------------------
def _round_up(n, m):
    return ((n + m - 1) // m) * m


def _tpu_config():
    """Generation-aware tile targets and VMEM budget."""
    kind = ""
    try:
        kind = jax.devices()[0].device_kind.lower()
    except Exception:  # pragma: no cover - defensive
        pass

    is_v5e = ("v5 lite" in kind) or ("v5e" in kind) or ("v5litepod" in kind)
    looks_v7 = "v7" in kind

    vmem_cap = None
    try:
        vmem_cap = getattr(pltpu.get_tpu_info(), "vmem_capacity_bytes", None)
    except Exception:  # pragma: no cover - defensive
        vmem_cap = None
    if vmem_cap is None:
        vmem_cap = (64 << 20) if looks_v7 else (128 << 20)

    two_cores = looks_v7 or vmem_cap <= (80 << 20)

    if is_v5e:
        tm_target, tk_target, align = 256, 1024, 128
    else:  # v6e / v7x
        tm_target, tk_target, align = 512, 1024, 256

    # ~105 MiB on 128 MiB chips, ~52 MiB on v7x's 64 MiB VMEM.
    vmem_limit = min(int(vmem_cap * 0.82), 112 << 20)

    return dict(tm=tm_target, tk=tk_target, align=align,
                vmem_limit=vmem_limit, two_cores=two_cores)


def _footprint(tm, tk, d_model_p, out_bytes):
    """Approx VMEM bytes for double-buffered inputs/outputs + f32 acc."""
    return (2 * tm * d_model_p * 2            # x (bf16)
            + 2 * d_model_p * tk * 2          # W1 (bf16)
            + 2 * tk * d_model_p * 2          # W2 (bf16)
            + 2 * tm * d_model_p * out_bytes  # output
            + tm * d_model_p * 4              # acc scratch
            + 2 * (tk + d_model_p) * 4 * 2)   # biases (f32)


def _select_feature_tiles(d_model, hidden, cfg, out_bytes):
    """Pick padded feature dims + hidden tile (M-independent)."""
    align = 128 if d_model <= 128 else cfg["align"]
    d_model_p = _round_up(d_model, align)
    hidden_128 = _round_up(hidden, 128)
    budget = cfg["vmem_limit"] - (2 << 20)
    tm = cfg["tm"]

    def fits(tk_):
        return _footprint(tm, tk_, d_model_p, out_bytes) <= budget

    # Resident weights: keep whole W1/W2 in VMEM, single k step, no acc RMW.
    w_bytes = 2 * 2 * d_model_p * hidden_128 * 2  # both weights, double-buffered
    if fits(hidden_128) and w_bytes <= int(budget * 0.6):
        return d_model_p, hidden_128, hidden_128

    # Otherwise split the hidden dim; shrink tk until it fits.
    tk = _round_up(min(cfg["tk"], hidden_128), 128)
    while tk > 128 and not fits(tk):
        tk = max(128, tk - 256)
    hidden_p = _round_up(hidden, tk)
    return d_model_p, tk, hidden_p


def _select_tm(M, d_model_p, tk, cfg, out_bytes):
    budget = cfg["vmem_limit"] - (2 << 20)
    tm = cfg["tm"]
    # v7x: make sure there are >= 2 row tiles so both TensorCores are used.
    if cfg["two_cores"] and M >= 256:
        tm = min(tm, _round_up(-(-M // 2), 128))
    tm = min(tm, _round_up(M, 16))            # tiny-M: single small tile
    while tm > 128 and _footprint(tm, tk, d_model_p, out_bytes) > budget:
        tm = max(128, tm - 128)
    return tm


# ---------------------------------------------------------------------------
# Wrapper (weights padded/cast once; x handled per call)
# ---------------------------------------------------------------------------
def make_feed_forward(w1, b1, w2, b2, *, compute_dtype=jnp.bfloat16,
                      out_dtype=None):
    """Builds a FeedForward apply fn.  Weight pad/cast is hoisted here."""
    cfg = _tpu_config()
    d_model, hidden = w1.shape
    out_bytes = jnp.dtype(out_dtype).itemsize if out_dtype is not None else 4

    d_model_p, tk, hidden_p = _select_feature_tiles(d_model, hidden, cfg,
                                                    out_bytes)

    # --- one-time weight/bias padding + cast (exact under zero padding) ----
    w1c = w1.astype(compute_dtype)
    if (d_model_p, hidden_p) != (d_model, hidden):
        w1c = jnp.zeros((d_model_p, hidden_p), compute_dtype
                        ).at[:d_model, :hidden].set(w1c)
    w2c = w2.astype(compute_dtype)
    if (hidden_p, d_model_p) != (hidden, d_model):
        w2c = jnp.zeros((hidden_p, d_model_p), compute_dtype
                        ).at[:hidden, :d_model].set(w2c)
    b1p = jnp.zeros((1, hidden_p), jnp.float32
                    ).at[0, :hidden].set(b1.astype(jnp.float32))
    b2p = jnp.zeros((1, d_model_p), jnp.float32
                    ).at[0, :d_model].set(b2.astype(jnp.float32))

    nk = hidden_p // tk

    def apply(x):
        lead = x.shape[:-1]
        out_dt = out_dtype if out_dtype is not None else x.dtype
        x2d = x.reshape(-1, d_model)
        M = x2d.shape[0]

        tm = _select_tm(M, d_model_p, tk, cfg, jnp.dtype(out_dt).itemsize)
        M_p = _round_up(M, tm)

        # Only pad / cast x when actually needed.
        xc = x2d if x2d.dtype == compute_dtype else x2d.astype(compute_dtype)
        pad_m, pad_d = M_p - M, d_model_p - d_model
        if pad_m or pad_d:
            xc = jnp.pad(xc, ((0, pad_m), (0, pad_d)))

        grid = (M_p // tm, nk)

        out2d = pl.pallas_call(
            ffn_kernel,
            out_shape=jax.ShapeDtypeStruct((M_p, d_model_p), out_dt),
            grid_spec=pltpu.PrefetchScalarGridSpec(
                num_scalar_prefetch=0,
                grid=grid,
                in_specs=[
                    pl.BlockSpec((tm, d_model_p), lambda i, k: (i, 0)),  # x
                    pl.BlockSpec((d_model_p, tk), lambda i, k: (0, k)),  # W1
                    pl.BlockSpec((1, tk), lambda i, k: (0, k)),          # b1
                    pl.BlockSpec((tk, d_model_p), lambda i, k: (k, 0)),  # W2
                    pl.BlockSpec((1, d_model_p), lambda i, k: (0, 0)),   # b2
                ],
                out_specs=pl.BlockSpec((tm, d_model_p), lambda i, k: (i, 0)),
                scratch_shapes=[pltpu.VMEM((tm, d_model_p), jnp.float32)],
            ),
            compiler_params=pltpu.CompilerParams(
                dimension_semantics=("parallel", "arbitrary"),
                vmem_limit_bytes=cfg["vmem_limit"],
            ),
        )(xc, w1c, b1p, w2c, b2p)

        if pad_m or pad_d:
            out2d = out2d[:M, :d_model]
        return out2d.reshape(*lead, d_model)

    return apply


def feed_forward(x, w1, b1, w2, b2, **kwargs):
    """Convenience one-shot call (weights re-prepared each call)."""
    return make_feed_forward(w1, b1, w2, b2, **kwargs)(x)


def reference(x, w1, b1, w2, b2, compute_dtype=jnp.bfloat16):
    # Mirrors the kernel's compute dtype (bf16 matmuls, f32 accumulation).
    xc = x.astype(compute_dtype)
    h = jnp.dot(xc, w1.astype(compute_dtype),
                preferred_element_type=jnp.float32) + b1
    h = jnp.maximum(h, 0.0)
    y = jnp.dot(h.astype(compute_dtype), w2.astype(compute_dtype),
                preferred_element_type=jnp.float32) + b2
    return y.astype(x.dtype)


if __name__ == "__main__":
    # Small shapes consistent with the module's forward: (batch, seq, d_model)
    batch, seq, d_model, hidden = 2, 8, 32, 64

    key = jax.random.PRNGKey(0)
    kx, kw1, kb1, kw2, kb2 = jax.random.split(key, 5)

    x = jax.random.normal(kx, (batch, seq, d_model), dtype=jnp.float32)

    # Deterministic params (PyTorch-Linear-like uniform init), stored as (in, out)
    lim1 = 1.0 / (d_model ** 0.5)
    w1 = jax.random.uniform(kw1, (d_model, hidden), minval=-lim1, maxval=lim1,
                            dtype=jnp.float32)
    b1 = jax.random.uniform(kb1, (hidden,), minval=-lim1, maxval=lim1,
                            dtype=jnp.float32)
    lim2 = 1.0 / (hidden ** 0.5)
    w2 = jax.random.uniform(kw2, (hidden, d_model), minval=-lim2, maxval=lim2,
                            dtype=jnp.float32)
    b2 = jax.random.uniform(kb2, (d_model,), minval=-lim2, maxval=lim2,
                            dtype=jnp.float32)

    ffn = make_feed_forward(w1, b1, w2, b2)   # weights padded/cast once
    out = ffn(x)
    out = jax.block_until_ready(out)

    ref = reference(x, w1, b1, w2, b2)
    assert out.shape == (batch, seq, d_model)
    assert jnp.allclose(out, ref, atol=1e-3, rtol=1e-3), float(
        jnp.max(jnp.abs(out - ref)))

    print("KERNEL_OK")
</pallas_src>

<mosaic_0001>
module attributes {stable_mosaic.version = 11 : i64} {
  func.func @ffn_kernel(%arg0: i32, %arg1: i32, %arg2: memref<16x128xbf16, #tpu.memory_space<vmem>>, %arg3: memref<128x128xbf16, #tpu.memory_space<vmem>>, %arg4: memref<1x128xf32, #tpu.memory_space<vmem>>, %arg5: memref<128x128xbf16, #tpu.memory_space<vmem>>, %arg6: memref<1x128xf32, #tpu.memory_space<vmem>>, %arg7: memref<16x128xf32, #tpu.memory_space<vmem>>, %arg8: memref<16x128xf32, #tpu.memory_space<vmem>>) attributes {dimension_semantics = [#tpu.dimension_semantics<parallel>, #tpu.dimension_semantics<arbitrary>], iteration_bounds = array<i64: 1, 1>, scalar_prefetch = 0 : i64, scratch_operands = 1 : i64, tpu.core_type = #tpu.core_type<tc>, window_params = [{transform_indices = @transform_0, window_bounds = array<i64: 16, 128>}, {transform_indices = @transform_1, window_bounds = array<i64: 128, 128>}, {transform_indices = @transform_2, window_bounds = array<i64: 1, 128>}, {transform_indices = @transform_3, window_bounds = array<i64: 128, 128>}, {pipeline_mode = #tpu.pipeline_mode<synchronous>, transform_indices = @transform_4, window_bounds = array<i64: 1, 128>}, {transform_indices = @transform_5, window_bounds = array<i64: 16, 128>}]} {
    %c0_i32 = arith.constant 0 : i32
    %0 = arith.cmpi eq, %arg1, %c0_i32 : i32
    %1 = arith.extui %0 : i1 to i32
    %c0_i32_0 = arith.constant 0 : i32
    %2 = arith.cmpi ne, %1, %c0_i32_0 : i32
    scf.if %2 {
      %c0_16 = arith.constant 0 : index
      %c0_17 = arith.constant 0 : index
      %20 = vector.load %arg6[%c0_16, %c0_17] : memref<1x128xf32, #tpu.memory_space<vmem>>, vector<1x128xf32>
      %21 = vector.shape_cast %20 : vector<1x128xf32> to vector<1x128xf32>
      %22 = vector.broadcast %21 : vector<1x128xf32> to vector<16x128xf32>
      %c0_18 = arith.constant 0 : index
      %c0_19 = arith.constant 0 : index
      %23 = vector.load %arg8[%c0_18, %c0_19] : memref<16x128xf32, #tpu.memory_space<vmem>>, vector<16x128xf32>
      tpu.vector_store %arg8[%c0_18, %c0_19], %22 {strides = array<i32>} : memref<16x128xf32, #tpu.memory_space<vmem>>, vector<16x128xf32>,
    } else {
    }
    %c0 = arith.constant 0 : index
    %c0_1 = arith.constant 0 : index
    %3 = vector.load %arg2[%c0, %c0_1] : memref<16x128xbf16, #tpu.memory_space<vmem>>, vector<16x128xbf16>
    %c0_2 = arith.constant 0 : index
    %c0_3 = arith.constant 0 : index
    %4 = vector.load %arg3[%c0_2, %c0_3] : memref<128x128xbf16, #tpu.memory_space<vmem>>, vector<128x128xbf16>
    %cst = arith.constant dense<0.000000e+00> : vector<16x128xf32>
    %5 = tpu.matmul %3, %4, %cst {dimension_numbers = #tpu.dot_dimension_numbers<[1], [0], [0], [1], [0, 0, 1, 1], [], []>} : vector<16x128xbf16>, vector<128x128xbf16>, vector<16x128xf32> -> vector<16x128xf32>
    %c0_4 = arith.constant 0 : index
    %c0_5 = arith.constant 0 : index
    %6 = vector.load %arg4[%c0_4, %c0_5] : memref<1x128xf32, #tpu.memory_space<vmem>>, vector<1x128xf32>
    %7 = vector.broadcast %6 : vector<1x128xf32> to vector<16x128xf32>
    %8 = arith.addf %5, %7 : vector<16x128xf32>
    %cst_6 = arith.constant 0.000000e+00 : f32
    %9 = vector.broadcast %cst_6 : f32 to vector<16x128xf32>
    %10 = arith.maximumf %8, %9 : vector<16x128xf32>
    %c0_7 = arith.constant 0 : index
    %c0_8 = arith.constant 0 : index
    %11 = vector.load %arg8[%c0_7, %c0_8] : memref<16x128xf32, #tpu.memory_space<vmem>>, vector<16x128xf32>
    %12 = arith.truncf %10 : vector<16x128xf32> to vector<16x128xbf16>
    %c0_9 = arith.constant 0 : index
    %c0_10 = arith.constant 0 : index
    %13 = vector.load %arg5[%c0_9, %c0_10] : memref<128x128xbf16, #tpu.memory_space<vmem>>, vector<128x128xbf16>
    %cst_11 = arith.constant dense<0.000000e+00> : vector<16x128xf32>
    %14 = tpu.matmul %12, %13, %cst_11 {dimension_numbers = #tpu.dot_dimension_numbers<[1], [0], [0], [1], [0, 0, 1, 1], [], []>} : vector<16x128xbf16>, vector<128x128xbf16>, vector<16x128xf32> -> vector<16x128xf32>
    %15 = arith.addf %11, %14 : vector<16x128xf32>
    %c0_12 = arith.constant 0 : index
    %c0_13 = arith.constant 0 : index
    %16 = vector.load %arg8[%c0_12, %c0_13] : memref<16x128xf32, #tpu.memory_space<vmem>>, vector<16x128xf32>
    tpu.vector_store %arg8[%c0_12, %c0_13], %15 {strides = array<i32>} : memref<16x128xf32, #tpu.memory_space<vmem>>, vector<16x128xf32>,
    %c0_i32_14 = arith.constant 0 : i32
    %17 = arith.cmpi eq, %arg1, %c0_i32_14 : i32
    %18 = arith.extui %17 : i1 to i32
    %c0_i32_15 = arith.constant 0 : i32
    %19 = arith.cmpi ne, %18, %c0_i32_15 : i32
    scf.if %19 {
      %c0_16 = arith.constant 0 : index
      %c0_17 = arith.constant 0 : index
      %20 = vector.load %arg8[%c0_16, %c0_17] : memref<16x128xf32, #tpu.memory_space<vmem>>, vector<16x128xf32>
      %c0_18 = arith.constant 0 : index
      %c0_19 = arith.constant 0 : index
      %21 = vector.load %arg7[%c0_18, %c0_19] : memref<16x128xf32, #tpu.memory_space<vmem>>, vector<16x128xf32>
      tpu.vector_store %arg7[%c0_18, %c0_19], %20 {strides = array<i32>} : memref<16x128xf32, #tpu.memory_space<vmem>>, vector<16x128xf32>,
    } else {
    }
    return
  }
  func.func @transform_0(%arg0: i32, %arg1: i32) -> (i32, i32) {
    %c0_i32 = arith.constant 0 : i32
    %c0_i32_0 = arith.constant 0 : i32
    return %arg0, %c0_i32 : i32, i32
  }
  func.func @transform_1(%arg0: i32, %arg1: i32) -> (i32, i32) {
    %c0_i32 = arith.constant 0 : i32
    %c0_i32_0 = arith.constant 0 : i32
    return %c0_i32, %arg1 : i32, i32
  }
  func.func @transform_2(%arg0: i32, %arg1: i32) -> (i32, i32) {
    %c0_i32 = arith.constant 0 : i32
    %c0_i32_0 = arith.constant 0 : i32
    return %c0_i32, %arg1 : i32, i32
  }
  func.func @transform_3(%arg0: i32, %arg1: i32) -> (i32, i32) {
    %c0_i32 = arith.constant 0 : i32
    %c0_i32_0 = arith.constant 0 : i32
    return %arg1, %c0_i32 : i32, i32
  }
  func.func @transform_4(%arg0: i32, %arg1: i32) -> (i32, i32) {
    %c0_i32 = arith.constant 0 : i32
    %c0_i32_0 = arith.constant 0 : i32
    %c0_i32_1 = arith.constant 0 : i32
    return %c0_i32, %c0_i32_0 : i32, i32
  }
  func.func @transform_5(%arg0: i32, %arg1: i32) -> (i32, i32) {
    %c0_i32 = arith.constant 0 : i32
    %c0_i32_0 = arith.constant 0 : i32
    return %arg0, %c0_i32 : i32, i32
  }
}

</mosaic_0001>

<llo_original>
// kernel: tpu_custom_call.1
$region0: #{tpu_custom_call.1}
  #allocation0 [shape = 'u32[]', space=smem, size = 0x4, offset = 0x4, fixed_abs, tag = 'smem constant byte address 0x4 - core index']
  #allocation1 [shape = 'u32[144,128]{1,0:T(1,128)}', space=vmem, size = 0x12000, scoped, tag = 'internal scratch']
  #allocation2 [shape = 'f32[16,128]{1,0:T(8,128)}', space=vmem, size = 0x2000, scoped, tag = 'scratch operand']
  %s0 = inlined_call_operand.hbm [shape: bf16[16,128], index: 0, kind: input, shape index: {}]
  %s1 = inlined_call_operand.hbm [shape: bf16[128,128], index: 1, kind: input, shape index: {}]
  %s2 = inlined_call_operand.vmem [shape: f32[1,128], index: 2, kind: input, shape index: {}]
  %s3 = inlined_call_operand.hbm [shape: bf16[128,128], index: 3, kind: input, shape index: {}]
  %s4 = inlined_call_operand.vmem [shape: f32[1,128], index: 4, kind: input, shape index: {}]
  %s5 = inlined_call_operand.hbm [shape: f32[16,128], index: 5, kind: output, shape index: {}]
  %s6 = sld [smem:[#allocation0]]
  $region50: #{tpu_custom_call.1} parent=0
    _
  %s8 = ssub.s32 1, %s6
  %s9 = scalar_select 0, %s8, %s6
  $region1: #{tpu_custom_call.1} parent=0
    #allocation3 [shape = 'u8[4096]{0}', space=vmem, size = 0x1000, scoped, tag = 'input window, operand 0, single buffered']
    #allocation4 [shape = 's32[1]{0}', space=sflag, size = 0x4, scoped, tag = 'scoped memory for tpu_custom_call.1']
    #allocation5 [shape = 's32[1]{0}', space=sflag, size = 0x4, scoped, tag = 'scoped memory for tpu_custom_call.1']
    #allocation6 [shape = 'u8[32768]{0}', space=vmem, size = 0x8000, scoped, tag = 'input window, operand 1, single buffered']
    #allocation7 [shape = 's32[1]{0}', space=sflag, size = 0x4, scoped, tag = 'scoped memory for tpu_custom_call.1']
    #allocation8 [shape = 'u8[32768]{0}', space=vmem, size = 0x8000, scoped, tag = 'input window, operand 3, single buffered']
    #allocation9 [shape = 'u8[8192]{0}', space=vmem, size = 0x2000, scoped, tag = 'output window, operand 0, single buffered']
    %10 = vsyncpa [#allocation4], 0
    %11 = vsyncpa [#allocation7], 0
    %12 = vsyncpa [#allocation5], 0
    // Predicated region
    $region2: #{tpu_custom_call.1} parent=1 // pred_check
      _
    $region3: #{tpu_custom_call.1} parent=1 // pred_check_branch
      %14 = sbr.rel (0) target = $region5
    $region4: #{tpu_custom_call.1} parent=1 // pred_region
      %s16 = ssub.s32 128, 128
      %17 = vsyncadd [#allocation4], %s16
      %s18 = sshll.u32 [#allocation3], 4
      %s19 = int_to_ptr.vmem [resolvable:$true] %s18
      %24 = dma.hbm_to_vmem [thread:$0]  %s0, 128, %s19, [#allocation4], 64, 64, 4
    $region5: #{tpu_custom_call.1} parent=1 // pred_fallthru
      _
    // Predicated region
    $region6: #{tpu_custom_call.1} parent=1 // pred_check
      _
    $region7: #{tpu_custom_call.1} parent=1 // pred_check_branch
      %26 = sbr.rel (0) target = $region9
    $region8: #{tpu_custom_call.1} parent=1 // pred_region
      %s28 = ssub.s32 1024, 1024
      %29 = vsyncadd [#allocation7], %s28
      %s30 = sshll.u32 [#allocation6], 4
      %s31 = int_to_ptr.vmem [resolvable:$true] %s30
      %36 = dma.hbm_to_vmem [thread:$0]  %s1, 1024, %s31, [#allocation7], 64, 64, 4
    $region9: #{tpu_custom_call.1} parent=1 // pred_fallthru
      _
    // Predicated region
    $region10: #{tpu_custom_call.1} parent=1 // pred_check
      _
    $region11: #{tpu_custom_call.1} parent=1 // pred_check_branch
      %38 = sbr.rel (0) target = $region13
    $region12: #{tpu_custom_call.1} parent=1 // pred_region
      _
    $region13: #{tpu_custom_call.1} parent=1 // pred_fallthru
      _
    // Predicated region
    $region14: #{tpu_custom_call.1} parent=1 // pred_check
      _
    $region15: #{tpu_custom_call.1} parent=1 // pred_check_branch
      %40 = sbr.rel (0) target = $region17
    $region16: #{tpu_custom_call.1} parent=1 // pred_region
      %s42 = ssub.s32 1024, 1024
      %43 = vsyncadd [#allocation7], %s42
      %s44 = sshll.u32 [#allocation8], 4
      %s45 = int_to_ptr.vmem [resolvable:$true] %s44
      %50 = dma.hbm_to_vmem [thread:$0]  %s3, 1024, %s45, [#allocation7], 64, 64, 4
    $region17: #{tpu_custom_call.1} parent=1 // pred_fallthru
      _
    // Predicated region
    $region18: #{tpu_custom_call.1} parent=1 // pred_check
      _
    $region19: #{tpu_custom_call.1} parent=1 // pred_check_branch
      %52 = sbr.rel (0) target = $region21
    $region20: #{tpu_custom_call.1} parent=1 // pred_region
      _
    $region21: #{tpu_custom_call.1} parent=1 // pred_fallthru
      _
    // Predicated region
    $region22: #{tpu_custom_call.1} parent=1 // pred_check
      _
    $region23: #{tpu_custom_call.1} parent=1 // pred_check_branch
      %54 = sbr.rel (0) target = $region25
    $region24: #{tpu_custom_call.1} parent=1 // pred_region
      %55 = dma.done [#allocation4], 128
    $region25: #{tpu_custom_call.1} parent=1 // pred_fallthru
      _
    // Predicated region
    $region26: #{tpu_custom_call.1} parent=1 // pred_check
      _
    $region27: #{tpu_custom_call.1} parent=1 // pred_check_branch
      %57 = sbr.rel (0) target = $region29
    $region28: #{tpu_custom_call.1} parent=1 // pred_region
      %58 = dma.done [#allocation7], 1024
    $region29: #{tpu_custom_call.1} parent=1 // pred_fallthru
      _
    // Predicated region
    $region30: #{tpu_custom_call.1} parent=1 // pred_check
      _
    $region31: #{tpu_custom_call.1} parent=1 // pred_check_branch
      %60 = sbr.rel (0) target = $region33
    $region32: #{tpu_custom_call.1} parent=1 // pred_region
      %61 = dma.done [#allocation7], 1024
    $region33: #{tpu_custom_call.1} parent=1 // pred_fallthru
      _
    %p63 = scmp.eq.s32.totalorder 0, 0
    // Predicated region
    $region34: #{tpu_custom_call.1} parent=1 // pred_check
      %p64 = pneg %p63
    $region35: #{tpu_custom_call.1} parent=1 // pred_check_branch
      %66 = sbr.rel (%p64) target = $region37
    $region36: #{tpu_custom_call.1} parent=1 // pred_region
      %v67 = vld [vmem:[%s4] sm:$0x1]
      %v69 = vlaneseq
      %v70 = vshrl.u32 %v69, 7
      %v71 = vsub.s32 0, %v70
      %v72 = vrot.slane %v67, %v71
      %74 = vst [vmem:[#allocation2] sm:$0xff] %v72
      %75 = vst [vmem:[#allocation2 + $0x8] sm:$0xff] %v72
    $region37: #{tpu_custom_call.1} parent=1 // pred_fallthru
      _
    %v76 = vld [vmem:[#allocation3] sm:$0xf]
    %v77 = vld [vmem:[#allocation3 + $0x4] sm:$0xf]
    %v78 = vld [vmem:[#allocation6] sm:$0xf]
    %v79 = vld [vmem:[#allocation6 + $0x4] sm:$0xf]
    %v80 = vld [vmem:[#allocation6 + $0x8] sm:$0xf]
    %v81 = vld [vmem:[#allocation6 + $0xc] sm:$0xf]
    %v82 = vld [vmem:[#allocation6 + $0x10] sm:$0xf]
    %v83 = vld [vmem:[#allocation6 + $0x14] sm:$0xf]
    %v84 = vld [vmem:[#allocation6 + $0x18] sm:$0xf]
    %v85 = vld [vmem:[#allocation6 + $0x1c] sm:$0xf]
    %v86 = vld [vmem:[#allocation6 + $0x20] sm:$0xf]
    %v87 = vld [vmem:[#allocation6 + $0x24] sm:$0xf]
    %v88 = vld [vmem:[#allocation6 + $0x28] sm:$0xf]
    %v89 = vld [vmem:[#allocation6 + $0x2c] sm:$0xf]
    %v90 = vld [vmem:[#allocation6 + $0x30] sm:$0xf]
    %v91 = vld [vmem:[#allocation6 + $0x34] sm:$0xf]
    %v92 = vld [vmem:[#allocation6 + $0x38] sm:$0xf]
    %v93 = vld [vmem:[#allocation6 + $0x3c] sm:$0xf]
    %v94 = vld [vmem:[%s2] sm:$0x1]
    %v96 = vlaneseq
    %v97 = vshrl.u32 %v96, 7
    %v98 = vsub.s32 0, %v97
    %v99 = vrot.slane %v94, %v98
    %v103 = vunpack.c.l.b16 %v76
    %v104 = vunpack.c.l.b16 %v77
    %v105 = vpack.c.b16 %v104, %v103
    %v123 = vunpack.c.l.b16 %v78
    %v124 = vunpack.c.l.b16 %v79
    %v125 = vunpack.c.l.b16 %v80
    %v126 = vunpack.c.l.b16 %v81
    %v127 = vunpack.c.l.b16 %v82
    %v128 = vunpack.c.l.b16 %v83
    %v129 = vunpack.c.l.b16 %v84
    %v130 = vunpack.c.l.b16 %v85
    %v131 = vunpack.c.l.b16 %v86
    %v132 = vunpack.c.l.b16 %v87
    %v133 = vunpack.c.l.b16 %v88
    %v134 = vunpack.c.l.b16 %v89
    %v135 = vunpack.c.l.b16 %v90
    %v136 = vunpack.c.l.b16 %v91
    %v137 = vunpack.c.l.b16 %v92
    %v138 = vunpack.c.l.b16 %v93
    %v139 = vpack.c.b16 %v124, %v123
    %v140 = vpack.c.b16 %v126, %v125
    %v141 = vpack.c.b16 %v128, %v127
    %v142 = vpack.c.b16 %v130, %v129
    %v143 = vpack.c.b16 %v132, %v131
    %v144 = vpack.c.b16 %v134, %v133
    %v145 = vpack.c.b16 %v136, %v135
    %v146 = vpack.c.b16 %v138, %v137
    %155 = vmatprep.subr.bf16.mxu0 0
    %156 = vmatpush1.bf16.msra.mxu0 %v146
    %157 = vmatprep.subr.bf16.mxu0 0
    %158 = vmatpush1.bf16.msra.mxu0 %v145
    %159 = vmatprep.subr.bf16.mxu0 0
    %160 = vmatpush1.bf16.msra.mxu0 %v144
    %161 = vmatprep.subr.bf16.mxu0 0
    %162 = vmatpush1.bf16.msra.mxu0 %v143
    %163 = vmatprep.subr.bf16.mxu0 0
    %164 = vmatpush1.bf16.msra.mxu0 %v142
    %165 = vmatprep.subr.bf16.mxu0 0
    %166 = vmatpush1.bf16.msra.mxu0 %v141
    %167 = vmatprep.subr.bf16.mxu0 0
    %168 = vmatpush1.bf16.msra.mxu0 %v140
    %169 = vmatprep.subr.bf16.mxu0 0
    %170 = vmatpush1.bf16.msra.mxu0 %v139
    %171 = vmatprep.subr.bf16.mxu0 0
    %172 = vmatpush2.bf16.msra.mxu0 0
    %173 = vmatprep.subr.bf16.mxu0 0
    %174 = vmatpush2.bf16.msra.mxu0 0
    %175 = vmatprep.subr.bf16.mxu0 0
    %176 = vmatpush2.bf16.msra.mxu0 0
    %177 = vmatprep.subr.bf16.mxu0 0
    %178 = vmatpush2.bf16.msra.mxu0 0
    %179 = vmatprep.subr.bf16.mxu0 0
    %180 = vmatpush2.bf16.msra.mxu0 0
    %181 = vmatprep.subr.bf16.mxu0 0
    %182 = vmatpush2.bf16.msra.mxu0 0
    %183 = vmatprep.subr.bf16.mxu0 0
    %184 = vmatpush2.bf16.msra.mxu0 0
    %185 = vmatprep.subr.bf16.mxu0 0
    %186 = vmatpush2.bf16.msra.mxu0 0
    %187 = vmatprep.mubr.bf16.mxu0 0
    %188 = vmatmul.mubr.bf16.gmra.mxu0 %v105
    %v189 = vpop.f32.mrf.mxu0
    %v190 = vadd.f32 %v99, %v189
    %v191 = vpop.f32.mrf.mxu0
    %v192 = vpop.f32.mrf.mxu0
    %v193 = vadd.f32 %v99, %v192
    %v194 = vpop.f32.mrf.mxu0
    %195 = vdwg.mxu0
    %v196 = vmax.f32 %v190, 0.0
    %v197 = vmax.f32 %v193, 0.0
    %v198 = vld [vmem:[#allocation2] sm:$0xff]
    %v199 = vld [vmem:[#allocation2 + $0x8] sm:$0xff]
    %v200 = vpack.c.bf16 %v197, %v196
    %v201 = vld [vmem:[#allocation8] sm:$0xf]
    %v202 = vld [vmem:[#allocation8 + $0x4] sm:$0xf]
    %v203 = vld [vmem:[#allocation8 + $0x8] sm:$0xf]
    %v204 = vld [vmem:[#allocation8 + $0xc] sm:$0xf]
    %v205 = vld [vmem:[#allocation8 + $0x10] sm:$0xf]
    %v206 = vld [vmem:[#allocation8 + $0x14] sm:$0xf]
    %v207 = vld [vmem:[#allocation8 + $0x18] sm:$0xf]
    %v208 = vld [vmem:[#allocation8 + $0x1c] sm:$0xf]
    %v209 = vld [vmem:[#allocation8 + $0x20] sm:$0xf]
    %v210 = vld [vmem:[#allocation8 + $0x24] sm:$0xf]
    %v211 = vld [vmem:[#allocation8 + $0x28] sm:$0xf]
    %v212 = vld [vmem:[#allocation8 + $0x2c] sm:$0xf]
    %v213 = vld [vmem:[#allocation8 + $0x30] sm:$0xf]
    %v214 = vld [vmem:[#allocation8 + $0x34] sm:$0xf]
    %v215 = vld [vmem:[#allocation8 + $0x38] sm:$0xf]
    %v216 = vld [vmem:[#allocation8 + $0x3c] sm:$0xf]
    %v233 = vunpack.c.l.b16 %v201
    %v234 = vunpack.c.l.b16 %v202
    %v235 = vunpack.c.l.b16 %v203
    %v236 = vunpack.c.l.b16 %v204
    %v237 = vunpack.c.l.b16 %v205
    %v238 = vunpack.c.l.b16 %v206
    %v239 = vunpack.c.l.b16 %v207
    %v240 = vunpack.c.l.b16 %v208
    %v241 = vunpack.c.l.b16 %v209
    %v242 = vunpack.c.l.b16 %v210
    %v243 = vunpack.c.l.b16 %v211
    %v244 = vunpack.c.l.b16 %v212
    %v245 = vunpack.c.l.b16 %v213
    %v246 = vunpack.c.l.b16 %v214
    %v247 = vunpack.c.l.b16 %v215
    %v248 = vunpack.c.l.b16 %v216
    %v249 = vpack.c.b16 %v234, %v233
    %v250 = vpack.c.b16 %v236, %v235
    %v251 = vpack.c.b16 %v238, %v237
    %v252 = vpack.c.b16 %v240, %v239
    %v253 = vpack.c.b16 %v242, %v241
    %v254 = vpack.c.b16 %v244, %v243
    %v255 = vpack.c.b16 %v246, %v245
    %v256 = vpack.c.b16 %v248, %v247
    %265 = vmatprep.subr.bf16.mxu0 0
    %266 = vmatpush1.bf16.msra.mxu0 %v256
    %267 = vmatprep.subr.bf16.mxu0 0
    %268 = vmatpush1.bf16.msra.mxu0 %v255
    %269 = vmatprep.subr.bf16.mxu0 0
    %270 = vmatpush1.bf16.msra.mxu0 %v254
    %271 = vmatprep.subr.bf16.mxu0 0
    %272 = vmatpush1.bf16.msra.mxu0 %v253
    %273 = vmatprep.subr.bf16.mxu0 0
    %274 = vmatpush1.bf16.msra.mxu0 %v252
    %275 = vmatprep.subr.bf16.mxu0 0
    %276 = vmatpush1.bf16.msra.mxu0 %v251
    %277 = vmatprep.subr.bf16.mxu0 0
    %278 = vmatpush1.bf16.msra.mxu0 %v250
    %279 = vmatprep.subr.bf16.mxu0 0
    %280 = vmatpush1.bf16.msra.mxu0 %v249
    %281 = vmatprep.subr.bf16.mxu0 0
    %282 = vmatpush2.bf16.msra.mxu0 0
    %283 = vmatprep.subr.bf16.mxu0 0
    %284 = vmatpush2.bf16.msra.mxu0 0
    %285 = vmatprep.subr.bf16.mxu0 0
    %286 = vmatpush2.bf16.msra.mxu0 0
    %287 = vmatprep.subr.bf16.mxu0 0
    %288 = vmatpush2.bf16.msra.mxu0 0
    %289 = vmatprep.subr.bf16.mxu0 0
    %290 = vmatpush2.bf16.msra.mxu0 0
    %291 = vmatprep.subr.bf16.mxu0 0
    %292 = vmatpush2.bf16.msra.mxu0 0
    %293 = vmatprep.subr.bf16.mxu0 0
    %294 = vmatpush2.bf16.msra.mxu0 0
    %295 = vmatprep.subr.bf16.mxu0 0
    %296 = vmatpush2.bf16.msra.mxu0 0
    %297 = vmatprep.mubr.bf16.mxu0 0
    %298 = vmatmul.mubr.bf16.gmra.mxu0 %v200
    %v299 = vpop.f32.mrf.mxu0
    %v300 = vadd.f32 0.0, %v299
    %v301 = vpop.f32.mrf.mxu0
    %v302 = vpop.f32.mrf.mxu0
    %v303 = vadd.f32 0.0, %v302
    %v304 = vpop.f32.mrf.mxu0
    %305 = vdwg.mxu0
    %v306 = vadd.f32 %v198, %v300
    %v307 = vadd.f32 %v199, %v303
    %308 = vst [vmem:[#allocation2] sm:$0xff] %v306
    %309 = vst [vmem:[#allocation2 + $0x8] sm:$0xff] %v307
    // Predicated region
    $region38: #{tpu_custom_call.1} parent=1 // pred_check
      %p310 = pneg %p63
    $region39: #{tpu_custom_call.1} parent=1 // pred_check_branch
      %312 = sbr.rel (%p310) target = $region41
    $region40: #{tpu_custom_call.1} parent=1 // pred_region
      %v313 = vld [vmem:[#allocation2] sm:$0xff]
      %v314 = vld [vmem:[#allocation2 + $0x8] sm:$0xff]
      %315 = vst [vmem:[#allocation9] sm:$0xff] %v313
      %316 = vst [vmem:[#allocation9 + $0x8] sm:$0xff] %v314
    $region41: #{tpu_custom_call.1} parent=1 // pred_fallthru
      _
    // Predicated region
    $region42: #{tpu_custom_call.1} parent=1 // pred_check
      _
    $region43: #{tpu_custom_call.1} parent=1 // pred_check_branch
      %318 = sbr.rel (0) target = $region45
    $region44: #{tpu_custom_call.1} parent=1 // pred_region
      %s320 = ssub.s32 256, 256
      %321 = vsyncadd [#allocation5], %s320
      %s322 = sshll.u32 [#allocation9], 4
      %s323 = int_to_ptr.vmem [resolvable:$true] %s322
      %328 = dma.vmem_to_hbm [thread:$0]  %s323, 256, %s5, [#allocation5], 128, 128, 8
    $region45: #{tpu_custom_call.1} parent=1 // pred_fallthru
      _
    // Predicated region
    $region46: #{tpu_custom_call.1} parent=1 // pred_check
      _
    $region47: #{tpu_custom_call.1} parent=1 // pred_check_branch
      %330 = sbr.rel (0) target = $region49
    $region48: #{tpu_custom_call.1} parent=1 // pred_region
      %331 = dma.done [#allocation5], 256
    $region49: #{tpu_custom_call.1} parent=1 // pred_fallthru
      _
    %332 = vsyncpa [#allocation4], 1
    %333 = vsyncpa [#allocation7], 1
    %334 = vsyncpa [#allocation5], 1

</llo_original>
